<compile_context>
chip_gen: v7x
topology: tpu7x:2x2x1
jax: 0.10.0
libtpu: 0.0.40
codegen_flags: <defaults>
</compile_context>

<pallas_src>
import functools

import jax
import jax.numpy as jnp
from jax.experimental import pallas as pl
from jax.experimental.pallas import tpu as pltpu


def _decoder_kernel(x_ref, w_ref, o_ref):
    # MXU matmul with f32 accumulation, then f32 sigmoid (EUP exp), in VMEM.
    acc = jnp.dot(x_ref[...], w_ref[...], preferred_element_type=jnp.float32)
    o_ref[...] = jax.nn.sigmoid(acc).astype(o_ref.dtype)


_PACK = 8                          # sublane count: output lanes become 8*G
_VMEM_LIMIT = 48 * 1024 * 1024     # covers double-buffered tiles, < v7x 64MiB


def _dim_semantics():
    # v7x has 2 TensorCores/chip: CORE_PARALLEL shards the independent batch
    # tiles across both (2x in-flight DMA engines).  v5e/v6e have 1 TC, so the
    # previously-validated "parallel" semantics is kept there.
    try:
        kind = jax.devices()[0].device_kind.lower()
    except Exception:
        kind = ""
    if ("v7" in kind or "tpu7" in kind) and hasattr(pltpu, "CORE_PARALLEL"):
        return (pltpu.CORE_PARALLEL,)
    return ("parallel",)


def _pick_tile(total, want):
    """Sublane-legal batch tile: multiple of 8, or the full extent."""
    if want >= total:
        return total
    t = max(8, (want // 8) * 8)
    return total if t >= total else t


@functools.partial(
    jax.jit, static_argnames=("tile_b", "compute_dtype", "out_dtype"))
def decoder_forward(inputs, fixed_signalP, *, tile_b=None,
                    compute_dtype=None, out_dtype=None):
    """inputs: [B, num_states], fixed_signalP: [num_states, num_signals]."""
    B, S = inputs.shape
    S2, G = fixed_signalP.shape
    assert S == S2
    out_dtype = inputs.dtype if out_dtype is None else out_dtype

    x = inputs if compute_dtype is None else inputs.astype(compute_dtype)
    w = fixed_signalP.astype(x.dtype)   # single-dtype matmul; w is tiny

    dim_sem = _dim_semantics()
    cparams = pltpu.CompilerParams(
        dimension_semantics=dim_sem, vmem_limit_bytes=_VMEM_LIMIT)

    if B % _PACK == 0 and B >= _PACK:
        # ---- lane-packed fast path -------------------------------------
        p = _PACK
        Bp, K, N = B // p, p * S, p * G
        xp = x.reshape(Bp, K)                            # free (row-major)
        wp = jnp.kron(jnp.eye(p, dtype=w.dtype), w)      # (K, N) block-diag
        tbp = _pick_tile(Bp, max(1, (32768 if tile_b is None else tile_b) // p))
        out = pl.pallas_call(
            _decoder_kernel,
            out_shape=jax.ShapeDtypeStruct((Bp, N), out_dtype),
            grid=(pl.cdiv(Bp, tbp),),
            in_specs=[
                # Batch-tiled, lane-dense input stream (256 lanes).
                pl.BlockSpec((tbp, K), lambda i: (i, 0)),
                # Weight: same block every step -> stays VMEM-resident.
                pl.BlockSpec((K, N), lambda i: (0, 0)),
            ],
            out_specs=pl.BlockSpec((tbp, N), lambda i: (i, 0)),
            compiler_params=cparams,
        )(xp, wp)
        return out.reshape(B, G)                         # free (row-major)

    # ---- fallback: B not a multiple of 8 (no padding, ragged last block) --
    tb = _pick_tile(B, 8192 if tile_b is None else tile_b)
    return pl.pallas_call(
        _decoder_kernel,
        out_shape=jax.ShapeDtypeStruct((B, G), out_dtype),
        grid=(pl.cdiv(B, tb),),
        in_specs=[
            pl.BlockSpec((tb, S), lambda i: (i, 0)),
            pl.BlockSpec((S, G), lambda i: (0, 0)),
        ],
        out_specs=pl.BlockSpec((tb, G), lambda i: (i, 0)),
        compiler_params=cparams,
    )(x, w)


class DecoderParams:
    """Deterministic synthetic parameters matching the PyTorch __init__."""

    def __init__(self, num_states, num_signals, hidden, dropout, key):
        k_beta, _k_bn_g, _k_bn_b, k_fixed = jax.random.split(key, 4)
        # nn.Linear(num_states, num_signals, bias=False) -> unused in forward.
        self.beta_weight = jax.random.normal(
            k_beta, (num_signals, num_states), jnp.float32) * 0.02
        # nn.BatchNorm1d(num_signals, affine=True) -> unused in forward.
        self.bn_gamma = jnp.ones((num_signals,), jnp.float32)
        self.bn_beta = jnp.zeros((num_signals,), jnp.float32)
        # fixed_signalP: [num_states, num_signals]
        self.fixed_signalP = jax.random.normal(
            k_fixed, (num_states, num_signals), jnp.float32)

    def __call__(self, inputs, **kwargs):
        return decoder_forward(inputs, self.fixed_signalP, **kwargs)


if __name__ == "__main__":
    key = jax.random.PRNGKey(0)
    k_params, k1, k2, k3 = jax.random.split(key, 4)

    batch, num_states, num_signals, hidden, dropout = 8, 32, 16, 32, 0.1
    decoder = DecoderParams(num_states, num_signals, hidden, dropout, k_params)
    W = decoder.fixed_signalP

    # --- small, module-sized input (packed path, single grid step) --------
    x_small = jax.random.uniform(k1, (batch, num_states), jnp.float32)
    out = jax.block_until_ready(decoder(x_small))
    ref = jax.nn.sigmoid(x_small @ W)
    assert out.shape == (batch, num_signals)
    assert jnp.allclose(out, ref, atol=1e-5, rtol=1e-5)

    # --- packed path, multiple grid steps + ragged last block -------------
    x_big = jax.random.uniform(k2, (1000, num_states), jnp.float32)
    out_big = jax.block_until_ready(decoder(x_big, tile_b=256))
    ref_big = jax.nn.sigmoid(x_big @ W)
    assert out_big.shape == (1000, num_signals)
    assert jnp.allclose(out_big, ref_big, atol=1e-5, rtol=1e-5)

    # --- fallback path: batch not divisible by 8, ragged tail, no padding --
    x_rag = jax.random.uniform(k3, (1003, num_states), jnp.float32)
    out_rag = jax.block_until_ready(decoder(x_rag, tile_b=256))
    ref_rag = jax.nn.sigmoid(x_rag @ W)
    assert out_rag.shape == (1003, num_signals)
    assert jnp.allclose(out_rag, ref_rag, atol=1e-5, rtol=1e-5)

    # --- bf16 streaming knob (halved HBM traffic; f32 accumulate/sigmoid) --
    x_bf16 = x_big.astype(jnp.bfloat16)
    out_bf = jax.block_until_ready(
        decoder(x_bf16, tile_b=256, out_dtype=jnp.float32))
    assert jnp.allclose(out_bf, ref_big, atol=3e-2, rtol=0)

    print("KERNEL_OK")
</pallas_src>

<mosaic_0001>
module attributes {stable_mosaic.version = 11 : i64} {
  func.func @_decoder_kernel(%arg0: i32, %arg1: memref<1x256xf32, #tpu.memory_space<vmem>>, %arg2: memref<256x128xf32, #tpu.memory_space<vmem>>, %arg3: memref<1x128xf32, #tpu.memory_space<vmem>>) attributes {dimension_semantics = [#tpu.dimension_semantics<parallel>], iteration_bounds = array<i64: 1>, scalar_prefetch = 0 : i64, scratch_operands = 0 : i64, tpu.core_type = #tpu.core_type<tc>, window_params = [{transform_indices = @transform_0, window_bounds = array<i64: 1, 256>}, {pipeline_mode = #tpu.pipeline_mode<synchronous>, transform_indices = @transform_1, window_bounds = array<i64: 256, 128>}, {transform_indices = @transform_2, window_bounds = array<i64: 1, 128>}]} {
    %c0 = arith.constant 0 : index
    %c0_0 = arith.constant 0 : index
    %0 = vector.load %arg1[%c0, %c0_0] : memref<1x256xf32, #tpu.memory_space<vmem>>, vector<1x256xf32>
    %c0_1 = arith.constant 0 : index
    %c0_2 = arith.constant 0 : index
    %1 = vector.load %arg2[%c0_1, %c0_2] : memref<256x128xf32, #tpu.memory_space<vmem>>, vector<256x128xf32>
    %cst = arith.constant dense<0.000000e+00> : vector<1x128xf32>
    %2 = tpu.matmul %0, %1, %cst {dimension_numbers = #tpu.dot_dimension_numbers<[1], [0], [0], [1], [0, 0, 1, 1], [], []>} : vector<1x256xf32>, vector<256x128xf32>, vector<1x128xf32> -> vector<1x128xf32>
    %3 = arith.negf %2 : vector<1x128xf32>
    %4 = math.exp %3 : vector<1x128xf32>
    %cst_3 = arith.constant 1.000000e+00 : f32
    %5 = vector.broadcast %cst_3 : f32 to vector<1x128xf32>
    %6 = arith.addf %5, %4 : vector<1x128xf32>
    %7 = arith.divf %5, %6 : vector<1x128xf32>
    %c0_4 = arith.constant 0 : index
    %c0_5 = arith.constant 0 : index
    %8 = vector.load %arg3[%c0_4, %c0_5] : memref<1x128xf32, #tpu.memory_space<vmem>>, vector<1x128xf32>
    tpu.vector_store %arg3[%c0_4, %c0_5], %7 {strides = array<i32>} : memref<1x128xf32, #tpu.memory_space<vmem>>, vector<1x128xf32>,
    return
  }
  func.func @transform_0(%arg0: i32) -> (i32, i32) {
    %c0_i32 = arith.constant 0 : i32
    %c0_i32_0 = arith.constant 0 : i32
    return %arg0, %c0_i32 : i32, i32
  }
  func.func @transform_1(%arg0: i32) -> (i32, i32) {
    %c0_i32 = arith.constant 0 : i32
    %c0_i32_0 = arith.constant 0 : i32
    %c0_i32_1 = arith.constant 0 : i32
    return %c0_i32, %c0_i32_0 : i32, i32
  }
  func.func @transform_2(%arg0: i32) -> (i32, i32) {
    %c0_i32 = arith.constant 0 : i32
    %c0_i32_0 = arith.constant 0 : i32
    return %arg0, %c0_i32 : i32, i32
  }
}

</mosaic_0001>

<llo_original>
// kernel: decoder_forward.1
$region0: #{decoder_forward.1}
  #allocation0 [shape = 'u32[]', space=smem, size = 0x4, offset = 0x4, fixed_abs, tag = 'smem constant byte address 0x4 - core index']
  #allocation1 [shape = 'u32[144,128]{1,0:T(1,128)}', space=vmem, size = 0x12000, scoped, tag = 'internal scratch']
  %s0 = inlined_call_operand.vmem [shape: f32[1,256], index: 0, kind: input, shape index: {}]
  %s1 = inlined_call_operand.vmem [shape: f32[256,128], index: 1, kind: input, shape index: {}]
  %s2 = inlined_call_operand.vmem [shape: f32[1,128], index: 2, kind: output, shape index: {}]
  %s3 = sld [smem:[#allocation0]]
  $region18: #{decoder_forward.1} parent=0
    _
  %s5 = ssub.s32 1, %s3
  %s6 = scalar_select 0, %s5, %s3
  // Predicated region
  $region2: #{decoder_forward.1} parent=0 // pred_check
    _
  $region3: #{decoder_forward.1} parent=0 // pred_check_branch
    %8 = sbr.rel (0) target = $region5
  $region4: #{decoder_forward.1} parent=0 // pred_region
    _
  $region5: #{decoder_forward.1} parent=0 // pred_fallthru
    _
  // Predicated region
  $region6: #{decoder_forward.1} parent=0 // pred_check
    _
  $region7: #{decoder_forward.1} parent=0 // pred_check_branch
    %10 = sbr.rel (0) target = $region9
  $region8: #{decoder_forward.1} parent=0 // pred_region
    _
  $region9: #{decoder_forward.1} parent=0 // pred_fallthru
    _
  %v11 = vld [vmem:[%s0] sm:$0x3]
  %v12 = vld [vmem:[%s1] sm:$0xff]
  %v13 = vld [vmem:[%s1 + $0x8] sm:$0xff]
  %v14 = vld [vmem:[%s1 + $0x10] sm:$0xff]
  %v15 = vld [vmem:[%s1 + $0x18] sm:$0xff]
  %v16 = vld [vmem:[%s1 + $0x20] sm:$0xff]
  %v17 = vld [vmem:[%s1 + $0x28] sm:$0xff]
  %v18 = vld [vmem:[%s1 + $0x30] sm:$0xff]
  %v19 = vld [vmem:[%s1 + $0x38] sm:$0xff]
  %v20 = vld [vmem:[%s1 + $0x40] sm:$0xff]
  %v21 = vld [vmem:[%s1 + $0x48] sm:$0xff]
  %v22 = vld [vmem:[%s1 + $0x50] sm:$0xff]
  %v23 = vld [vmem:[%s1 + $0x58] sm:$0xff]
  %v24 = vld [vmem:[%s1 + $0x60] sm:$0xff]
  %v25 = vld [vmem:[%s1 + $0x68] sm:$0xff]
  %v26 = vld [vmem:[%s1 + $0x70] sm:$0xff]
  %v27 = vld [vmem:[%s1 + $0x78] sm:$0xff]
  %v28 = vld [vmem:[%s1 + $0x80] sm:$0xff]
  %v29 = vld [vmem:[%s1 + $0x88] sm:$0xff]
  %v30 = vld [vmem:[%s1 + $0x90] sm:$0xff]
  %v31 = vld [vmem:[%s1 + $0x98] sm:$0xff]
  %v32 = vld [vmem:[%s1 + $0xa0] sm:$0xff]
  %v33 = vld [vmem:[%s1 + $0xa8] sm:$0xff]
  %v34 = vld [vmem:[%s1 + $0xb0] sm:$0xff]
  %v35 = vld [vmem:[%s1 + $0xb8] sm:$0xff]
  %v36 = vld [vmem:[%s1 + $0xc0] sm:$0xff]
  %v37 = vld [vmem:[%s1 + $0xc8] sm:$0xff]
  %v38 = vld [vmem:[%s1 + $0xd0] sm:$0xff]
  %v39 = vld [vmem:[%s1 + $0xd8] sm:$0xff]
  %v40 = vld [vmem:[%s1 + $0xe0] sm:$0xff]
  %v41 = vld [vmem:[%s1 + $0xe8] sm:$0xff]
  %v42 = vld [vmem:[%s1 + $0xf0] sm:$0xff]
  %v43 = vld [vmem:[%s1 + $0xf8] sm:$0xff]
  %v45 = vlaneseq
  %v46 = vshrl.u32 %v45, 7
  %v47 = vsub.s32 0, %v46
  %v48 = vrot.slane %v11, %v47
  %v49 = vlaneseq
  %v50 = vshrl.u32 %v49, 7
  %v51 = vsub.s32 1, %v50
  %v52 = vrot.slane %v11, %v51
  %55 = vmatprep.subr.mxu0 0.0
  %56 = vmatpush1.msra.mxu0 %v12
  %57 = vmatprep.subr.mxu0 0.0
  %58 = vmatpush1.msra.mxu0 %v13
  %59 = vmatprep.subr.mxu0 0.0
  %60 = vmatpush1.msra.mxu0 %v14
  %61 = vmatprep.subr.mxu0 0.0
  %62 = vmatpush1.msra.mxu0 %v15
  %63 = vmatprep.subr.mxu0 0.0
  %64 = vmatpush1.msra.mxu0 %v16
  %65 = vmatprep.subr.mxu0 0.0
  %66 = vmatpush1.msra.mxu0 %v17
  %67 = vmatprep.subr.mxu0 0.0
  %68 = vmatpush1.msra.mxu0 %v18
  %69 = vmatprep.subr.mxu0 0.0
  %70 = vmatpush1.msra.mxu0 %v19
  %71 = vmatprep.subr.mxu0 0.0
  %72 = vmatpush1.msra.mxu0 %v20
  %73 = vmatprep.subr.mxu0 0.0
  %74 = vmatpush1.msra.mxu0 %v21
  %75 = vmatprep.subr.mxu0 0.0
  %76 = vmatpush1.msra.mxu0 %v22
  %77 = vmatprep.subr.mxu0 0.0
  %78 = vmatpush1.msra.mxu0 %v23
  %79 = vmatprep.subr.mxu0 0.0
  %80 = vmatpush1.msra.mxu0 %v24
  %81 = vmatprep.subr.mxu0 0.0
  %82 = vmatpush1.msra.mxu0 %v25
  %83 = vmatprep.subr.mxu0 0.0
  %84 = vmatpush1.msra.mxu0 %v26
  %85 = vmatprep.subr.mxu0 0.0
  %86 = vmatpush1.msra.mxu0 %v27
  %87 = vmatprep.subr.mxu0 0.0
  %88 = vmatpush1.msra.mxu0 %v28
  %89 = vmatprep.subr.mxu0 0.0
  %90 = vmatpush1.msra.mxu0 %v29
  %91 = vmatprep.subr.mxu0 0.0
  %92 = vmatpush1.msra.mxu0 %v30
  %93 = vmatprep.subr.mxu0 0.0
  %94 = vmatpush1.msra.mxu0 %v31
  %95 = vmatprep.subr.mxu0 0.0
  %96 = vmatpush1.msra.mxu0 %v32
  %97 = vmatprep.subr.mxu0 0.0
  %98 = vmatpush1.msra.mxu0 %v33
  %99 = vmatprep.subr.mxu0 0.0
  %100 = vmatpush1.msra.mxu0 %v34
  %101 = vmatprep.subr.mxu0 0.0
  %102 = vmatpush1.msra.mxu0 %v35
  %103 = vmatprep.subr.mxu0 0.0
  %104 = vmatpush1.msra.mxu0 %v36
  %105 = vmatprep.subr.mxu0 0.0
  %106 = vmatpush1.msra.mxu0 %v37
  %107 = vmatprep.subr.mxu0 0.0
  %108 = vmatpush1.msra.mxu0 %v38
  %109 = vmatprep.subr.mxu0 0.0
  %110 = vmatpush1.msra.mxu0 %v39
  %111 = vmatprep.subr.mxu0 0.0
  %112 = vmatpush1.msra.mxu0 %v40
  %113 = vmatprep.subr.mxu0 0.0
  %114 = vmatpush1.msra.mxu0 %v41
  %115 = vmatprep.subr.mxu0 0.0
  %116 = vmatpush1.msra.mxu0 %v42
  %117 = vmatprep.subr.mxu0 0.0
  %118 = vmatpush1.msra.mxu0 %v43
  %119 = vmatprep.mubr.f32.mxu0 %v52
  %120 = vmatmul.mubr.f32.gmra.mrb[0].mxu0 %v48
  %v121 = vpop.f32.mrb[0].mxu0
  %v122 = vadd.f32 0.0, %v121
  %v123 = vpop.f32.mrb[0].mxu0
  %124 = vdwg.mxu0
  %v125 = vxor.u32 %v122, 2147483648
  %v126 = vmul.f32 %v125, 1.442695
  %v127 = vpow.pop %v126
  %v128 = vadd.f32 %v127, 1.0
  %v129 = vrcp.pop %v128
  %v130 = vmul.f32 1.0, %v129
  %131 = vst [vmem:[%s2] sm:$0x1] %v130
  // Predicated region
  $region10: #{decoder_forward.1} parent=0 // pred_check
    _
  $region11: #{decoder_forward.1} parent=0 // pred_check_branch
    %133 = sbr.rel (0) target = $region13
  $region12: #{decoder_forward.1} parent=0 // pred_region
    _
  $region13: #{decoder_forward.1} parent=0 // pred_fallthru
    _
  // Predicated region
  $region14: #{decoder_forward.1} parent=0 // pred_check
    _
  $region15: #{decoder_forward.1} parent=0 // pred_check_branch
    %135 = sbr.rel (0) target = $region17
  $region16: #{decoder_forward.1} parent=0 // pred_region
    _
  $region17: #{decoder_forward.1} parent=0 // pred_fallthru
    _

</llo_original>
